<compile_context>
chip_gen: v6e
topology: v6e:2x2x1
jax: 0.10.0
libtpu: 0.0.40
codegen_flags: <defaults>
</compile_context>

<pallas_src>
import jax
import jax.numpy as jnp
from jax.experimental import pallas as pl
from jax.experimental.pallas import tpu as pltpu

_LANE_WIDTH = 512          # lane-dense output: multiple of 128
_SUBLANE = 8
_MAX_BLOCK_ROWS = 1024     # 1024 * 512 * 4 B = 2 MiB per buffer
_VMEM_LIMIT_BYTES = 32 * 1024 * 1024  # 4 streams x 2 bufs x 2 MiB = 16 MiB + headroom


def _round_up(x: int, m: int) -> int:
    return ((x + m - 1) // m) * m


def _zrelu_kernel(re_ref, im_ref, ore_ref, oim_ref):
    # Planar f32 tiles; one mask shared by both components (angle in [0, pi/2]
    # <=> re >= 0 and im >= 0).  ~2.5 VALU ops per output vreg, no XLU work.
    re = re_ref[...]
    im = im_ref[...]
    mask = (re >= 0.0) & (im >= 0.0)
    zero = jnp.zeros_like(re)
    ore_ref[...] = jnp.where(mask, re, zero)
    oim_ref[...] = jnp.where(mask, im, zero)


@jax.jit
def zrelu(z: jax.Array) -> jax.Array:
    """Apply zReLU to a complex64 array of any shape via a Pallas TPU kernel."""
    if z.dtype != jnp.complex64:
        # TODO(synk): complex128 would need f64 planes (poorly supported on TPU); reject.
        raise TypeError(f"zrelu kernel expects complex64 input, got {z.dtype}")
    orig_shape = z.shape
    n = z.size
    if n == 0:
        return z

    # One fused extraction pass: complex -> two planar f32 planes, padded to a single
    # (8, 512) tile multiple so the slab reshape is exact (pad fuses into the fusion).
    padded_n = _round_up(n, _SUBLANE * _LANE_WIDTH)
    pad = padded_n - n
    re = jnp.real(z).reshape(-1)
    im = jnp.imag(z).reshape(-1)
    if pad:
        re = jnp.pad(re, (0, pad))
        im = jnp.pad(im, (0, pad))
    rows = padded_n // _LANE_WIDTH                    # multiple of 8
    re = re.reshape(rows, _LANE_WIDTH)
    im = im.reshape(rows, _LANE_WIDTH)

    block_rows = min(rows, _MAX_BLOCK_ROWS)           # multiple of 8 (rows and cap are)
    grid = pl.cdiv(rows, block_rows)                  # ragged last block handled by Pallas

    spec = pl.BlockSpec((block_rows, _LANE_WIDTH), lambda i: (i, 0))
    # TODO(synk): on v7x, verify "parallel" shards the grid across both TensorCores;
    # otherwise switch this axis to pltpu.CORE_PARALLEL.
    out_re, out_im = pl.pallas_call(
        _zrelu_kernel,
        out_shape=(
            jax.ShapeDtypeStruct((rows, _LANE_WIDTH), jnp.float32),
            jax.ShapeDtypeStruct((rows, _LANE_WIDTH), jnp.float32),
        ),
        grid_spec=pltpu.PrefetchScalarGridSpec(
            num_scalar_prefetch=0,
            grid=(grid,),
            in_specs=[spec, spec],
            out_specs=[spec, spec],
        ),
        compiler_params=pltpu.CompilerParams(
            dimension_semantics=("parallel",),
            vmem_limit_bytes=_VMEM_LIMIT_BYTES,
        ),
        input_output_aliases={0: 0, 1: 1},  # donate planar slabs (same shape/dtype)
    )(re, im)

    # One fused recombine pass: slice off the tile padding, restore shape, rebuild complex.
    out_re = out_re.reshape(-1)[:n].reshape(orig_shape)
    out_im = out_im.reshape(-1)[:n].reshape(orig_shape)
    return jax.lax.complex(out_re, out_im)


if __name__ == "__main__":
    key = jax.random.PRNGKey(0)
    k_re, k_im = jax.random.split(key)
    shape = (2, 4, 16, 16)  # NCHW
    x_re = jax.random.normal(k_re, shape, dtype=jnp.float32)
    x_im = jax.random.normal(k_im, shape, dtype=jnp.float32)
    x = jax.lax.complex(x_re, x_im)  # complex64

    out = jax.block_until_ready(zrelu(x))

    # Reference check (pure JAX): keep z where angle in [0, pi/2].
    ang = jnp.angle(x)
    mask = (ang >= 0) & (ang <= jnp.pi / 2)
    ref = x * mask.astype(x.dtype)
    assert out.shape == x.shape and out.dtype == x.dtype
    assert jnp.allclose(out, ref, atol=0.0, rtol=0.0), "mismatch vs reference"

    print("KERNEL_OK")
</pallas_src>

<mosaic_0001>
module attributes {stable_mosaic.version = 11 : i64} {
  func.func @_zrelu_kernel(%arg0: i32, %arg1: memref<8x512xf32, #tpu.memory_space<vmem>>, %arg2: memref<8x512xf32, #tpu.memory_space<vmem>>, %arg3: memref<8x512xf32, #tpu.memory_space<vmem>>, %arg4: memref<8x512xf32, #tpu.memory_space<vmem>>) attributes {dimension_semantics = [#tpu.dimension_semantics<parallel>], iteration_bounds = array<i64: 1>, scalar_prefetch = 0 : i64, scratch_operands = 0 : i64, tpu.core_type = #tpu.core_type<tc>, window_params = [{transform_indices = @transform_0, window_bounds = array<i64: 8, 512>}, {transform_indices = @transform_1, window_bounds = array<i64: 8, 512>}, {transform_indices = @transform_2, window_bounds = array<i64: 8, 512>}, {transform_indices = @transform_3, window_bounds = array<i64: 8, 512>}]} {
    %c0 = arith.constant 0 : index
    %c0_0 = arith.constant 0 : index
    %0 = vector.load %arg1[%c0, %c0_0] : memref<8x512xf32, #tpu.memory_space<vmem>>, vector<8x512xf32>
    %c0_1 = arith.constant 0 : index
    %c0_2 = arith.constant 0 : index
    %1 = vector.load %arg2[%c0_1, %c0_2] : memref<8x512xf32, #tpu.memory_space<vmem>>, vector<8x512xf32>
    %cst = arith.constant 0.000000e+00 : f32
    %2 = vector.broadcast %cst : f32 to vector<8x512xf32>
    %3 = arith.cmpf oge, %0, %2 : vector<8x512xf32>
    %cst_3 = arith.constant 0.000000e+00 : f32
    %4 = vector.broadcast %cst_3 : f32 to vector<8x512xf32>
    %5 = arith.cmpf oge, %1, %4 : vector<8x512xf32>
    %6 = arith.andi %3, %5 : vector<8x512xi1>
    %cst_4 = arith.constant 0.000000e+00 : f32
    %7 = vector.broadcast %cst_4 : f32 to vector<8x512xf32>
    %8 = arith.select %6, %0, %7 : vector<8x512xi1>, vector<8x512xf32>
    %c0_5 = arith.constant 0 : index
    %c0_6 = arith.constant 0 : index
    %9 = vector.load %arg3[%c0_5, %c0_6] : memref<8x512xf32, #tpu.memory_space<vmem>>, vector<8x512xf32>
    tpu.vector_store %arg3[%c0_5, %c0_6], %8 {strides = array<i32>} : memref<8x512xf32, #tpu.memory_space<vmem>>, vector<8x512xf32>,
    %10 = arith.select %6, %1, %7 : vector<8x512xi1>, vector<8x512xf32>
    %c0_7 = arith.constant 0 : index
    %c0_8 = arith.constant 0 : index
    %11 = vector.load %arg4[%c0_7, %c0_8] : memref<8x512xf32, #tpu.memory_space<vmem>>, vector<8x512xf32>
    tpu.vector_store %arg4[%c0_7, %c0_8], %10 {strides = array<i32>} : memref<8x512xf32, #tpu.memory_space<vmem>>, vector<8x512xf32>,
    return
  }
  func.func @transform_0(%arg0: i32) -> (i32, i32) {
    %c0_i32 = arith.constant 0 : i32
    %c0_i32_0 = arith.constant 0 : i32
    return %arg0, %c0_i32 : i32, i32
  }
  func.func @transform_1(%arg0: i32) -> (i32, i32) {
    %c0_i32 = arith.constant 0 : i32
    %c0_i32_0 = arith.constant 0 : i32
    return %arg0, %c0_i32 : i32, i32
  }
  func.func @transform_2(%arg0: i32) -> (i32, i32) {
    %c0_i32 = arith.constant 0 : i32
    %c0_i32_0 = arith.constant 0 : i32
    return %arg0, %c0_i32 : i32, i32
  }
  func.func @transform_3(%arg0: i32) -> (i32, i32) {
    %c0_i32 = arith.constant 0 : i32
    %c0_i32_0 = arith.constant 0 : i32
    return %arg0, %c0_i32 : i32, i32
  }
}

</mosaic_0001>

<llo_original>
// kernel: custom-call.1
$region0: #{custom-call.1}
  %s0 = inlined_call_operand.hbm [shape: c64[2,4,16,16], index: 0, kind: input, shape index: {}]
  %s1 = inlined_call_operand.vmem [shape: f32[2,4,16,16], index: 1, kind: output, shape index: {}]
  %s2 = scalar_lea.hbm %s0, 2048
  $region1: #{custom-call.1} parent=0
    #allocation0 [shape = 's32[1]{0}', space=sflag, size = 0x4, scoped, tag = 'scoped memory for custom-call.1']
    %3 = vsyncpa [#allocation0], 0
    %s4 = sshll.u32 %s1, 4
    %s5 = int_to_ptr.vmem [resolvable:$true] %s4
    %7 = dma.hbm_to_vmem [thread:$0]  %s2, 2048, %s5, [#allocation0]
    %8 = dma.done [#allocation0], 2048
    %9 = vsyncpa [#allocation0], 1

// kernel: custom-call
$region0: #{custom-call}
  %s0 = inlined_call_operand.hbm [shape: c64[2,4,16,16], index: 0, kind: input, shape index: {}]
  %s1 = inlined_call_operand.vmem [shape: f32[2,4,16,16], index: 1, kind: output, shape index: {}]
  $region1: #{custom-call} parent=0
    #allocation0 [shape = 's32[1]{0}', space=sflag, size = 0x4, scoped, tag = 'scoped memory for custom-call']
    %2 = vsyncpa [#allocation0], 0
    %s3 = sshll.u32 %s1, 4
    %s4 = int_to_ptr.vmem [resolvable:$true] %s3
    %6 = dma.hbm_to_vmem [thread:$0]  %s0, 2048, %s4, [#allocation0]
    %7 = dma.done [#allocation0], 2048
    %8 = vsyncpa [#allocation0], 1

// kernel: custom-call.2
$region0: #{custom-call.2}
  %s0 = inlined_call_operand.vmem [shape: f32[2,4,16,16], index: 0, kind: input, shape index: {}]
  %s1 = inlined_call_operand.vmem [shape: f32[2,4,16,16], index: 1, kind: input, shape index: {}]
  %s2 = inlined_call_operand.hbm [shape: c64[2,4,16,16], index: 2, kind: output, shape index: {}]
  %s3 = scalar_lea.hbm %s2, 2048
  $region1: #{custom-call.2} parent=0
    #allocation0 [shape = 's32[1]{0}', space=sflag, size = 0x4, scoped, tag = 'scoped memory for custom-call.2']
    %4 = vsyncpa [#allocation0], 0
    %s5 = sshll.u32 %s0, 4
    %s6 = int_to_ptr.vmem [resolvable:$true] %s5
    %8 = dma.vmem_to_hbm [thread:$0]  %s6, 2048, %s2, [#allocation0]
    %9 = dma.done [#allocation0], 2048
    %10 = vsyncpa [#allocation0], 1
  $region2: #{custom-call.2} parent=0
    #allocation1 [shape = 's32[1]{0}', space=sflag, size = 0x4, scoped, tag = 'scoped memory for custom-call.2']
    %11 = vsyncpa [#allocation1], 0
    %s12 = sshll.u32 %s1, 4
    %s13 = int_to_ptr.vmem [resolvable:$true] %s12
    %15 = dma.vmem_to_hbm [thread:$0]  %s13, 2048, %s3, [#allocation1]
    %16 = dma.done [#allocation1], 2048
    %17 = vsyncpa [#allocation1], 1

// kernel: zrelu.1
$region0: #{zrelu.1}
  #allocation0 [shape = 'u32[]', space=smem, size = 0x4, offset = 0x4, fixed_abs, tag = 'smem constant byte address 0x4 - core index']
  #allocation1 [shape = 'u32[144,128]{1,0:T(1,128)}', space=vmem, size = 0x12000, scoped, tag = 'internal scratch']
  %s0 = inlined_call_operand.vmem [shape: f32[8,512], index: 0, kind: input, shape index: {}, may-alias: {0,2}]
  %s1 = inlined_call_operand.vmem [shape: f32[8,512], index: 1, kind: input, shape index: {}, may-alias: {1,3}]
  %s2 = inlined_call_operand.vmem [shape: f32[8,512], index: 2, kind: output, shape index: {0}, may-alias: {0,2}]
  %s3 = inlined_call_operand.vmem [shape: f32[8,512], index: 3, kind: output, shape index: {1}, may-alias: {1,3}]
  %4 = xla_tuple %s2, %s3
  %s5 = sld [smem:[#allocation0]]
  $region26: #{zrelu.1} parent=0
    _
  %s7 = ssub.s32 1, %s5
  %s8 = scalar_select 0, %s7, %s5
  // Predicated region
  $region2: #{zrelu.1} parent=0 // pred_check
    _
  $region3: #{zrelu.1} parent=0 // pred_check_branch
    %10 = sbr.rel (0) target = $region5
  $region4: #{zrelu.1} parent=0 // pred_region
    _
  $region5: #{zrelu.1} parent=0 // pred_fallthru
    _
  // Predicated region
  $region6: #{zrelu.1} parent=0 // pred_check
    _
  $region7: #{zrelu.1} parent=0 // pred_check_branch
    %12 = sbr.rel (0) target = $region9
  $region8: #{zrelu.1} parent=0 // pred_region
    _
  $region9: #{zrelu.1} parent=0 // pred_fallthru
    _
  %v13 = vld [vmem:[%s0] sm:$0xff]
  %v14 = vld [vmem:[%s0 + $0x8] sm:$0xff]
  %v15 = vld [vmem:[%s0 + $0x10] sm:$0xff]
  %v16 = vld [vmem:[%s0 + $0x18] sm:$0xff]
  %v17 = vld [vmem:[%s1] sm:$0xff]
  %v18 = vld [vmem:[%s1 + $0x8] sm:$0xff]
  %v19 = vld [vmem:[%s1 + $0x10] sm:$0xff]
  %v20 = vld [vmem:[%s1 + $0x18] sm:$0xff]
  %vm21 = vcmp.ge.f32.partialorder %v13, 0.0
  %vm22 = vcmp.ge.f32.partialorder %v14, 0.0
  %vm23 = vcmp.ge.f32.partialorder %v15, 0.0
  %vm24 = vcmp.ge.f32.partialorder %v16, 0.0
  %vm25 = vcmp.ge.f32.partialorder %v17, 0.0
  %vm26 = vcmp.ge.f32.partialorder %v18, 0.0
  %vm27 = vcmp.ge.f32.partialorder %v19, 0.0
  %vm28 = vcmp.ge.f32.partialorder %v20, 0.0
  %vm29 = vmand %vm21, %vm25
  %vm30 = vmand %vm22, %vm26
  %vm31 = vmand %vm23, %vm27
  %vm32 = vmand %vm24, %vm28
  %v33 = vsel %vm29, %v13, 0.0
  %v34 = vsel %vm30, %v14, 0.0
  %v35 = vsel %vm31, %v15, 0.0
  %v36 = vsel %vm32, %v16, 0.0
  %37 = vst [vmem:[%s2] sm:$0xff] %v33
  %38 = vst [vmem:[%s2 + $0x8] sm:$0xff] %v34
  %39 = vst [vmem:[%s2 + $0x10] sm:$0xff] %v35
  %40 = vst [vmem:[%s2 + $0x18] sm:$0xff] %v36
  %v41 = vsel %vm29, %v17, 0.0
  %v42 = vsel %vm30, %v18, 0.0
  %v43 = vsel %vm31, %v19, 0.0
  %v44 = vsel %vm32, %v20, 0.0
  %45 = vst [vmem:[%s3] sm:$0xff] %v41
  %46 = vst [vmem:[%s3 + $0x8] sm:$0xff] %v42
  %47 = vst [vmem:[%s3 + $0x10] sm:$0xff] %v43
  %48 = vst [vmem:[%s3 + $0x18] sm:$0xff] %v44
  // Predicated region
  $region10: #{zrelu.1} parent=0 // pred_check
    _
  $region11: #{zrelu.1} parent=0 // pred_check_branch
    %50 = sbr.rel (0) target = $region13
  $region12: #{zrelu.1} parent=0 // pred_region
    _
  $region13: #{zrelu.1} parent=0 // pred_fallthru
    _
  // Predicated region
  $region14: #{zrelu.1} parent=0 // pred_check
    _
  $region15: #{zrelu.1} parent=0 // pred_check_branch
    %52 = sbr.rel (0) target = $region17
  $region16: #{zrelu.1} parent=0 // pred_region
    _
  $region17: #{zrelu.1} parent=0 // pred_fallthru
    _
  // Predicated region
  $region18: #{zrelu.1} parent=0 // pred_check
    _
  $region19: #{zrelu.1} parent=0 // pred_check_branch
    %54 = sbr.rel (0) target = $region21
  $region20: #{zrelu.1} parent=0 // pred_region
    _
  $region21: #{zrelu.1} parent=0 // pred_fallthru
    _
  // Predicated region
  $region22: #{zrelu.1} parent=0 // pred_check
    _
  $region23: #{zrelu.1} parent=0 // pred_check_branch
    %56 = sbr.rel (0) target = $region25
  $region24: #{zrelu.1} parent=0 // pred_region
    _
  $region25: #{zrelu.1} parent=0 // pred_fallthru
    _

</llo_original>
